<compile_context>
chip_gen: v7x
topology: tpu7x:2x2x1
jax: 0.10.0
libtpu: 0.0.40
codegen_flags: <defaults>
</compile_context>

<pallas_src>
from functools import partial

import jax
import jax.numpy as jnp
from jax.experimental import pallas as pl
from jax.experimental.pallas import tpu as pltpu


# ------------------------------- kernels ------------------------------------


def _pad_kernel_flat(x_ref, o_ref, *, pad_type, ntimes, hw):
    # x_ref: (tbc, HW)             -- one input frame per (b*c) row, lane-dense
    # o_ref: (tbc, ntimes*HW)      -- full flattened time slab, lane-dense
    frame = x_ref[...]
    if pad_type == "repeat":
        for t in range(ntimes):                      # static unrolled, 128-aligned stores
            o_ref[:, t * hw:(t + 1) * hw] = frame
    else:  # "zero"
        o_ref[:, 0:hw] = frame                       # frame at t=0
        if ntimes > 1:                               # zeros for t>=1 only (no overwrite)
            o_ref[:, hw:ntimes * hw] = jnp.zeros(
                (o_ref.shape[0], (ntimes - 1) * hw), o_ref.dtype
            )


def _pad_kernel_per_frame(x_ref, o_ref, *, pad_type):
    # One frame block per grid step (fallback for very large ntimes*HW slabs).
    # x_ref: (tbc, HW)   o_ref: (tbc, HW)   grid = (n_blocks, ntimes)
    if pad_type == "repeat":
        o_ref[...] = x_ref[...]
    else:  # "zero"
        t = pl.program_id(1)

        @pl.when(t == 0)
        def _():
            o_ref[...] = x_ref[...]

        @pl.when(t > 0)
        def _():
            o_ref[...] = jnp.zeros_like(o_ref)


def _pad_kernel_3d(x_ref, o_ref, *, pad_type):
    # Fallback for HW not a multiple of 128 (small frames). Single full-block store.
    # x_ref: (tbc, HW)   o_ref: (tbc, ntimes, HW)
    frame = x_ref[...][:, None, :]                   # (tbc, 1, HW)
    if pad_type == "repeat":
        o_ref[...] = jnp.broadcast_to(frame, o_ref.shape)
    else:  # "zero"
        t_idx = jax.lax.broadcasted_iota(jnp.int32, o_ref.shape, 1)
        o_ref[...] = jnp.where(t_idx == 0, frame, jnp.zeros_like(frame)).astype(o_ref.dtype)


# ------------------------------- wrapper -------------------------------------


def _ceil_div(a, b):
    return -(-a // b)


def _round_up(a, b):
    return _ceil_div(a, b) * b


def _sublane_multiple(dtype):
    # Native sublane packing: 8 rows for 32-bit, 16 for 16-bit, 32 for 8-bit.
    return {4: 8, 2: 16, 1: 32}.get(jnp.dtype(dtype).itemsize, 8)


# Explicit budgets: total double-buffered (in + out) block footprint per step,
# and the scoped-VMEM limit we request. 48 MiB scoped is safe on v5e/v6e
# (128 MiB physical) and leaves >=16 MiB headroom under v7x's 64 MiB ceiling;
# the ~32 MiB footprint keeps output blocks in the 8-16 MiB sweet spot.
_VMEM_FOOTPRINT_BUDGET = 32 * 1024 * 1024
_VMEM_LIMIT_BYTES = 48 * 1024 * 1024


def pad_im2video(x, ntimes, pad_type, time_dim=2):
    """JAX/Pallas equivalent of PadIm2Video.forward (time_dim fixed to 2)."""
    assert ntimes > 0
    assert pad_type in ("zero", "repeat")
    assert time_dim == 2, "kernel implemented for time_dim=2 (NCTHW layout)"

    if x.ndim == 4:
        x = x[:, :, None, :, :]  # unsqueeze time dim -> (B, C, 1, H, W)

    if x.shape[time_dim] != 1:
        # Nothing to pad / repeat; identity (matches PyTorch module behavior).
        return x

    B, C, _, H, W = x.shape
    N = B * C
    HW = H * W
    x2 = x.reshape(N, HW)  # lane-dense flattened frames (wrapper reshape is free)

    itemsize = jnp.dtype(x.dtype).itemsize
    sub = _sublane_multiple(x.dtype)

    cost = pl.CostEstimate(
        flops=0,
        transcendentals=0,
        bytes_accessed=N * HW * itemsize * (1 + ntimes),
    )

    if HW % 128 == 0:
        # Double-buffered (in + out) bytes per output row for the full-slab path.
        per_row_bytes = 2 * HW * itemsize * (1 + ntimes)
        tbc_budget = (_VMEM_FOOTPRINT_BUDGET // per_row_bytes) // sub * sub

        if tbc_budget >= sub or N <= sub:
            # ---------------- Path A: full (tbc, ntimes*HW) slab per step ----------------
            if N <= sub:
                tbc = N                                         # full-dim block
            elif N <= tbc_budget:
                # Whole array fits the budget; still give the parallel axis >=2
                # steps so v7x megacore can shard the HBM writeback.
                tbc = max(sub, min(tbc_budget, _round_up(_ceil_div(N, 2), sub)))
            else:
                tbc = max(sub, tbc_budget)

            grid = (pl.cdiv(N, tbc),)
            out = pl.pallas_call(
                partial(_pad_kernel_flat, pad_type=pad_type, ntimes=ntimes, hw=HW),
                out_shape=jax.ShapeDtypeStruct((N, ntimes * HW), x.dtype),
                grid_spec=pltpu.PrefetchScalarGridSpec(
                    num_scalar_prefetch=0,
                    grid=grid,
                    in_specs=[pl.BlockSpec((tbc, HW), lambda i: (i, 0))],
                    out_specs=pl.BlockSpec((tbc, ntimes * HW), lambda i: (i, 0)),
                ),
                compiler_params=pltpu.CompilerParams(
                    dimension_semantics=("parallel",),
                    vmem_limit_bytes=_VMEM_LIMIT_BYTES,
                ),
                cost_estimate=cost,
            )(x2)
            return out.reshape(B, C, ntimes, H, W)

        # ---------------- Path B: one lane-dense (tbc, HW) frame block per step ---------
        per_row_bytes_b = 4 * HW * itemsize          # 2x (in_block + out_block), one frame
        tbc = (_VMEM_FOOTPRINT_BUDGET // per_row_bytes_b) // sub * sub
        # TODO(synk): pathologically huge frames (sub rows of HW alone exceeding the
        # budget) fall back to the sublane minimum and rely on vmem_limit_bytes headroom.
        tbc = max(tbc, sub)
        if N <= sub:
            tbc = N
        else:
            tbc = min(tbc, _round_up(N, sub))

        grid = (pl.cdiv(N, tbc), ntimes)
        out = pl.pallas_call(
            partial(_pad_kernel_per_frame, pad_type=pad_type),
            out_shape=jax.ShapeDtypeStruct((N, ntimes * HW), x.dtype),
            grid_spec=pltpu.PrefetchScalarGridSpec(
                num_scalar_prefetch=0,
                grid=grid,
                in_specs=[pl.BlockSpec((tbc, HW), lambda i, t: (i, 0))],
                out_specs=pl.BlockSpec((tbc, HW), lambda i, t: (i, t)),
            ),
            compiler_params=pltpu.CompilerParams(
                dimension_semantics=("parallel", "arbitrary"),
                vmem_limit_bytes=_VMEM_LIMIT_BYTES,
            ),
            cost_estimate=cost,
        )(x2)
        return out.reshape(B, C, ntimes, H, W)

    # ---------------- Path C: HW not 128-aligned -> 3-D block fallback ------------------
    # Account for real padded VMEM footprint: ntimes pads to the sublane multiple,
    # HW pads to a multiple of 128.
    hw_pad = _round_up(HW, 128)
    nt_pad = _round_up(ntimes, sub)
    per_row_bytes_c = 2 * itemsize * (hw_pad + nt_pad * hw_pad)
    tbc_budget_c = max(sub, (_VMEM_FOOTPRINT_BUDGET // per_row_bytes_c) // sub * sub)
    if N <= sub:
        tbc = N
    elif N <= tbc_budget_c:
        tbc = max(sub, min(tbc_budget_c, _round_up(_ceil_div(N, 2), sub)))
    else:
        tbc = tbc_budget_c

    grid = (pl.cdiv(N, tbc),)
    out3 = pl.pallas_call(
        partial(_pad_kernel_3d, pad_type=pad_type),
        out_shape=jax.ShapeDtypeStruct((N, ntimes, HW), x.dtype),
        grid_spec=pltpu.PrefetchScalarGridSpec(
            num_scalar_prefetch=0,
            grid=grid,
            in_specs=[pl.BlockSpec((tbc, HW), lambda i: (i, 0))],
            out_specs=pl.BlockSpec((tbc, ntimes, HW), lambda i: (i, 0, 0)),
        ),
        compiler_params=pltpu.CompilerParams(
            dimension_semantics=("parallel",),
            vmem_limit_bytes=_VMEM_LIMIT_BYTES,
        ),
        cost_estimate=cost,
    )(x2)
    return out3.reshape(B, C, ntimes, H, W)


# --------------------------------- test ---------------------------------------


if __name__ == "__main__":
    key = jax.random.PRNGKey(0)
    B, C, H, W = 2, 4, 16, 16
    ntimes = 8

    x = jax.random.normal(key, (B, C, H, W), dtype=jnp.float32)

    # 'repeat' mode
    y_rep = pad_im2video(x, ntimes=ntimes, pad_type="repeat")
    y_rep = jax.block_until_ready(y_rep)
    ref_rep = jnp.broadcast_to(x[:, :, None, :, :], (B, C, ntimes, H, W))
    assert y_rep.shape == (B, C, ntimes, H, W)
    assert jnp.allclose(y_rep, ref_rep)

    # 'zero' mode
    y_zero = pad_im2video(x, ntimes=ntimes, pad_type="zero")
    y_zero = jax.block_until_ready(y_zero)
    ref_zero = jnp.concatenate(
        [x[:, :, None, :, :], jnp.zeros((B, C, ntimes - 1, H, W), x.dtype)], axis=2
    )
    assert y_zero.shape == (B, C, ntimes, H, W)
    assert jnp.allclose(y_zero, ref_zero)

    print("KERNEL_OK")
</pallas_src>

<mosaic_0001>
module attributes {stable_mosaic.version = 11 : i64} {
  func.func @_pad_kernel_flat(%arg0: i32, %arg1: memref<8x256xf32, #tpu.memory_space<vmem>>, %arg2: memref<8x2048xf32, #tpu.memory_space<vmem>>) attributes {dimension_semantics = [#tpu.dimension_semantics<parallel>], iteration_bounds = array<i64: 1>, scalar_prefetch = 0 : i64, scratch_operands = 0 : i64, tpu.core_type = #tpu.core_type<tc>, window_params = [{transform_indices = @transform_0, window_bounds = array<i64: 8, 256>}, {transform_indices = @transform_1, window_bounds = array<i64: 8, 2048>}]} {
    %c0 = arith.constant 0 : index
    %c0_0 = arith.constant 0 : index
    %0 = vector.load %arg1[%c0, %c0_0] : memref<8x256xf32, #tpu.memory_space<vmem>>, vector<8x256xf32>
    %c0_1 = arith.constant 0 : index
    %c0_2 = arith.constant 0 : index
    %1 = vector.load %arg2[%c0_1, %c0_2] : memref<8x2048xf32, #tpu.memory_space<vmem>>, vector<8x256xf32>
    tpu.vector_store %arg2[%c0_1, %c0_2], %0 {strides = array<i32>} : memref<8x2048xf32, #tpu.memory_space<vmem>>, vector<8x256xf32>,
    %c0_3 = arith.constant 0 : index
    %c256 = arith.constant 256 : index
    %2 = vector.load %arg2[%c0_3, %c256] : memref<8x2048xf32, #tpu.memory_space<vmem>>, vector<8x256xf32>
    tpu.vector_store %arg2[%c0_3, %c256], %0 {strides = array<i32>} : memref<8x2048xf32, #tpu.memory_space<vmem>>, vector<8x256xf32>,
    %c0_4 = arith.constant 0 : index
    %c512 = arith.constant 512 : index
    %3 = vector.load %arg2[%c0_4, %c512] : memref<8x2048xf32, #tpu.memory_space<vmem>>, vector<8x256xf32>
    tpu.vector_store %arg2[%c0_4, %c512], %0 {strides = array<i32>} : memref<8x2048xf32, #tpu.memory_space<vmem>>, vector<8x256xf32>,
    %c0_5 = arith.constant 0 : index
    %c768 = arith.constant 768 : index
    %4 = vector.load %arg2[%c0_5, %c768] : memref<8x2048xf32, #tpu.memory_space<vmem>>, vector<8x256xf32>
    tpu.vector_store %arg2[%c0_5, %c768], %0 {strides = array<i32>} : memref<8x2048xf32, #tpu.memory_space<vmem>>, vector<8x256xf32>,
    %c0_6 = arith.constant 0 : index
    %c1024 = arith.constant 1024 : index
    %5 = vector.load %arg2[%c0_6, %c1024] : memref<8x2048xf32, #tpu.memory_space<vmem>>, vector<8x256xf32>
    tpu.vector_store %arg2[%c0_6, %c1024], %0 {strides = array<i32>} : memref<8x2048xf32, #tpu.memory_space<vmem>>, vector<8x256xf32>,
    %c0_7 = arith.constant 0 : index
    %c1280 = arith.constant 1280 : index
    %6 = vector.load %arg2[%c0_7, %c1280] : memref<8x2048xf32, #tpu.memory_space<vmem>>, vector<8x256xf32>
    tpu.vector_store %arg2[%c0_7, %c1280], %0 {strides = array<i32>} : memref<8x2048xf32, #tpu.memory_space<vmem>>, vector<8x256xf32>,
    %c0_8 = arith.constant 0 : index
    %c1536 = arith.constant 1536 : index
    %7 = vector.load %arg2[%c0_8, %c1536] : memref<8x2048xf32, #tpu.memory_space<vmem>>, vector<8x256xf32>
    tpu.vector_store %arg2[%c0_8, %c1536], %0 {strides = array<i32>} : memref<8x2048xf32, #tpu.memory_space<vmem>>, vector<8x256xf32>,
    %c0_9 = arith.constant 0 : index
    %c1792 = arith.constant 1792 : index
    %8 = vector.load %arg2[%c0_9, %c1792] : memref<8x2048xf32, #tpu.memory_space<vmem>>, vector<8x256xf32>
    tpu.vector_store %arg2[%c0_9, %c1792], %0 {strides = array<i32>} : memref<8x2048xf32, #tpu.memory_space<vmem>>, vector<8x256xf32>,
    return
  }
  func.func @transform_0(%arg0: i32) -> (i32, i32) {
    %c0_i32 = arith.constant 0 : i32
    %c0_i32_0 = arith.constant 0 : i32
    return %arg0, %c0_i32 : i32, i32
  }
  func.func @transform_1(%arg0: i32) -> (i32, i32) {
    %c0_i32 = arith.constant 0 : i32
    %c0_i32_0 = arith.constant 0 : i32
    return %arg0, %c0_i32 : i32, i32
  }
}

</mosaic_0001>

<llo_original>
// kernel: tpu_custom_call.1
$region0: #{tpu_custom_call.1}
  #allocation0 [shape = 'u32[]', space=smem, size = 0x4, offset = 0x4, fixed_abs, tag = 'smem constant byte address 0x4 - core index']
  #allocation1 [shape = 'u32[144,128]{1,0:T(1,128)}', space=vmem, size = 0x12000, scoped, tag = 'internal scratch']
  %s0 = inlined_call_operand.hbm [shape: f32[8,256], index: 0, kind: input, shape index: {}]
  %s1 = inlined_call_operand.hbm [shape: f32[8,2048], index: 1, kind: output, shape index: {}]
  %s2 = sld [smem:[#allocation0]]
  $region18: #{tpu_custom_call.1} parent=0
    _
  %s4 = ssub.s32 1, %s2
  %s5 = scalar_select 0, %s4, %s2
  $region1: #{tpu_custom_call.1} parent=0
    #allocation2 [shape = 'u8[8192]{0}', space=vmem, size = 0x2000, scoped, tag = 'input window, operand 0, single buffered']
    #allocation3 [shape = 's32[1]{0}', space=sflag, size = 0x4, scoped, tag = 'scoped memory for tpu_custom_call.1']
    #allocation4 [shape = 's32[1]{0}', space=sflag, size = 0x4, scoped, tag = 'scoped memory for tpu_custom_call.1']
    #allocation5 [shape = 'u8[65536]{0}', space=vmem, size = 0x10000, scoped, tag = 'output window, operand 0, single buffered']
    %6 = vsyncpa [#allocation3], 0
    %7 = vsyncpa [#allocation4], 0
    // Predicated region
    $region2: #{tpu_custom_call.1} parent=1 // pred_check
      _
    $region3: #{tpu_custom_call.1} parent=1 // pred_check_branch
      %9 = sbr.rel (0) target = $region5
    $region4: #{tpu_custom_call.1} parent=1 // pred_region
      %s11 = ssub.s32 256, 256
      %12 = vsyncadd [#allocation3], %s11
      %s14 = sshll.u32 [#allocation2], 4
      %s15 = int_to_ptr.vmem [resolvable:$true] %s14
      %17 = dma.hbm_to_vmem [thread:$0]  %s0, 256, %s15, [#allocation3]
    $region5: #{tpu_custom_call.1} parent=1 // pred_fallthru
      _
    // Predicated region
    $region6: #{tpu_custom_call.1} parent=1 // pred_check
      _
    $region7: #{tpu_custom_call.1} parent=1 // pred_check_branch
      %19 = sbr.rel (0) target = $region9
    $region8: #{tpu_custom_call.1} parent=1 // pred_region
      %20 = dma.done [#allocation3], 256
    $region9: #{tpu_custom_call.1} parent=1 // pred_fallthru
      _
    %v21 = vld [vmem:[#allocation2] sm:$0xff]
    %v22 = vld [vmem:[#allocation2 + $0x8] sm:$0xff]
    %23 = vst [vmem:[#allocation5] sm:$0xff] %v21
    %24 = vst [vmem:[#allocation5 + $0x8] sm:$0xff] %v22
    %25 = vst [vmem:[#allocation5 + $0x10] sm:$0xff] %v21
    %26 = vst [vmem:[#allocation5 + $0x18] sm:$0xff] %v22
    %27 = vst [vmem:[#allocation5 + $0x20] sm:$0xff] %v21
    %28 = vst [vmem:[#allocation5 + $0x28] sm:$0xff] %v22
    %29 = vst [vmem:[#allocation5 + $0x30] sm:$0xff] %v21
    %30 = vst [vmem:[#allocation5 + $0x38] sm:$0xff] %v22
    %31 = vst [vmem:[#allocation5 + $0x40] sm:$0xff] %v21
    %32 = vst [vmem:[#allocation5 + $0x48] sm:$0xff] %v22
    %33 = vst [vmem:[#allocation5 + $0x50] sm:$0xff] %v21
    %34 = vst [vmem:[#allocation5 + $0x58] sm:$0xff] %v22
    %35 = vst [vmem:[#allocation5 + $0x60] sm:$0xff] %v21
    %36 = vst [vmem:[#allocation5 + $0x68] sm:$0xff] %v22
    %37 = vst [vmem:[#allocation5 + $0x70] sm:$0xff] %v21
    %38 = vst [vmem:[#allocation5 + $0x78] sm:$0xff] %v22
    // Predicated region
    $region10: #{tpu_custom_call.1} parent=1 // pred_check
      _
    $region11: #{tpu_custom_call.1} parent=1 // pred_check_branch
      %40 = sbr.rel (0) target = $region13
    $region12: #{tpu_custom_call.1} parent=1 // pred_region
      %s42 = ssub.s32 2048, 2048
      %43 = vsyncadd [#allocation4], %s42
      %s45 = sshll.u32 [#allocation5], 4
      %s46 = int_to_ptr.vmem [resolvable:$true] %s45
      %48 = dma.vmem_to_hbm [thread:$0]  %s46, 2048, %s1, [#allocation4]
    $region13: #{tpu_custom_call.1} parent=1 // pred_fallthru
      _
    // Predicated region
    $region14: #{tpu_custom_call.1} parent=1 // pred_check
      _
    $region15: #{tpu_custom_call.1} parent=1 // pred_check_branch
      %50 = sbr.rel (0) target = $region17
    $region16: #{tpu_custom_call.1} parent=1 // pred_region
      %51 = dma.done [#allocation4], 2048
    $region17: #{tpu_custom_call.1} parent=1 // pred_fallthru
      _
    %52 = vsyncpa [#allocation3], 1
    %53 = vsyncpa [#allocation4], 1

</llo_original>
